<compile_context>
chip_gen: v5e
topology: v5e:2x2
jax: 0.10.0
libtpu: 0.0.40
codegen_flags: <defaults>
</compile_context>

<pallas_src>
import functools
import math

import jax
import jax.numpy as jnp
from jax.experimental import pallas as pl
from jax.experimental.pallas import tpu as pltpu


def _vmem_limit_bytes() -> int:
    """Per-generation VMEM budget (~3/4 of physical, capped at 100 MiB)."""
    try:
        info = pltpu.get_tpu_info()
        cap = getattr(info, "vmem_capacity_bytes", None)
        if cap:
            return int(min(cap * 3 // 4, 100 * 1024 * 1024))
    except Exception:
        pass
    return 48 * 1024 * 1024  # safe everywhere (v7x has 64 MiB physical VMEM)


def _largest_divisor_leq(n: int, cap: int) -> int:
    for c in range(min(n, max(1, cap)), 0, -1):
        if n % c == 0:
            return c
    return 1


def _pick_q_tile(t: int) -> int:
    if t <= 512:
        return t
    for cand in (512, 256, 128):
        if t % cand == 0:
            return cand
    return t


# ---------------------------------------------------------------------------
# Kernel 1: qkv = x @ W_attn + b_attn  ->  bf16 q/k/v slabs (scale folded into q)
# ---------------------------------------------------------------------------
def _qkv_kernel(x_ref, w_ref, b_ref, q_ref, k_ref, v_ref, *, scale: bool, head_dim: int):
    nx = q_ref.shape[2]
    x = x_ref[0].astype(jnp.bfloat16)                                   # (tq, nx) MXU operand
    qkv = jnp.dot(x, w_ref[...], preferred_element_type=jnp.float32) + b_ref[0]
    q = qkv[:, 0 * nx:1 * nx]
    if scale:
        q = q * (1.0 / math.sqrt(head_dim))                             # fold 1/sqrt(d), f32 VPU
    q_ref[0] = q.astype(jnp.bfloat16)
    k_ref[0] = qkv[:, 1 * nx:2 * nx].astype(jnp.bfloat16)
    v_ref[0] = qkv[:, 2 * nx:3 * nx].astype(jnp.bfloat16)


# ---------------------------------------------------------------------------
# Kernel 2: fused attention + c_proj over grid (B, Tq-tiles, head-blocks).
#   q block: (1, Hb, Tq, d)   k/v blocks: (1, Hb, T, d)
#   mask_mul: (1, Tq, T) bf16, mask_add: (Tq, T) f32
#   wp block: (Hb, d, nx) (per-head W_proj slices), bp: (1, nx)
#   outputs:  a (1, Tq, nx) f32 [accumulated over head blocks],
#             optional probs (1, Hb, Tq, T) bf16
# ---------------------------------------------------------------------------
def _attn_proj_kernel(q_ref, k_ref, v_ref, mmul_ref, madd_ref, wp_ref, bp_ref,
                      *rest, n_head_block: int, output_attentions: bool):
    if output_attentions:
        a_ref, p_ref, acc_ref = rest
    else:
        a_ref, acc_ref = rest
        p_ref = None

    hb = pl.program_id(2)

    @pl.when(hb == 0)
    def _():
        acc_ref[...] = jnp.zeros_like(acc_ref)

    q = q_ref[0]                                    # (Hb, Tq, d) bf16 (already scaled)
    k = k_ref[0]                                    # (Hb, T,  d) bf16
    v = v_ref[0]                                    # (Hb, T,  d) bf16

    # s[h,i,j] = sum_d q[h,i,d] * k[h,j,d]   (leading-batch MXU matmul, f32 accumulate)
    s = jnp.einsum('hqd,hkd->hqk', q, k, preferred_element_type=jnp.float32)

    # w = s * (bias + tril(adj)) - 10000*(1-bias); masks precomputed in the wrapper and
    # widened to f32 so all VPU arithmetic stays f32 (no bf16 VPU on v5e).
    mmul = mmul_ref[0].astype(jnp.float32)[None]    # (1, Tq, T)
    madd = madd_ref[...][None]                      # (1, Tq, T), already f32
    w = s * mmul + madd

    # numerically-stable softmax over keys
    w = w - jnp.max(w, axis=-1, keepdims=True)
    e = jnp.exp(w)
    p = e * pl.reciprocal(jnp.sum(e, axis=-1, keepdims=True), approx=True)   # (Hb, Tq, T) f32

    if output_attentions:
        p_ref[0] = p.astype(p_ref.dtype)

    # per-head context, then fold c_proj into a lane-dense (Tq, nx) accumulator:
    #   acc += sum_h  (P_h @ V_h) @ Wp[h*d:(h+1)*d, :]
    o = jnp.einsum('hqk,hkd->hqd', p.astype(jnp.bfloat16), v,
                   preferred_element_type=jnp.float32)                       # (Hb, Tq, d) f32
    o_bf = o.astype(jnp.bfloat16)
    for h in range(n_head_block):                   # small static unroll (Hb is tiny)
        acc_ref[...] += jnp.dot(o_bf[h], wp_ref[h], preferred_element_type=jnp.float32)

    @pl.when(hb == pl.num_programs(2) - 1)
    def _():
        a_ref[0] = acc_ref[...] + bp_ref[0]


# ---------------------------------------------------------------------------
# Wrapper
# ---------------------------------------------------------------------------
def strct_attention(x, w_attn, b_attn, w_proj, b_proj, bias_mask, adj_mx,
                    *, n_head: int, scale: bool = False, output_attentions: bool = True):
    """x: (B,T,nx) f32, adj_mx: (B,T,T) dense, bias_mask: (T,T).

    Returns (a, present, attn_probs) [attn_probs only if output_attentions],
    matching StrctAttention.forward with layer_past/attention_mask/head_mask = None.
    a is f32; present and attn_probs are bf16 (cast if exact f32 is required).
    """
    B, T, nx = x.shape
    assert nx % n_head == 0
    d = nx // n_head

    vmem_limit = _vmem_limit_bytes()

    # bf16 weights (native MXU dtype, half the HBM/VMEM); f32 biases for f32 accumulation.
    w_attn_bf = w_attn.astype(jnp.bfloat16)
    wp3 = w_proj.astype(jnp.bfloat16).reshape(n_head, d, nx)       # per-head c_proj slices
    b_attn2 = b_attn.reshape(1, 3 * nx).astype(jnp.float32)
    b_proj2 = b_proj.reshape(1, nx).astype(jnp.float32)

    tq = _pick_q_tile(T)
    ntq = T // tq
    hb = _largest_divisor_leq(n_head, max(1, 256 // d))            # heads per attention step
    nhb = n_head // hb

    # ---- 1) qkv projection ----
    qkv_kernel = functools.partial(_qkv_kernel, scale=scale, head_dim=d)
    q, k, v = pl.pallas_call(
        qkv_kernel,
        out_shape=(jax.ShapeDtypeStruct((B, T, nx), jnp.bfloat16),) * 3,
        grid=(B, ntq),
        in_specs=[
            pl.BlockSpec((1, tq, nx), lambda b, t: (b, t, 0)),      # x
            pl.BlockSpec((nx, 3 * nx), lambda b, t: (0, 0)),        # W_attn (grid-invariant)
            pl.BlockSpec((1, 3 * nx), lambda b, t: (0, 0)),         # b_attn
        ],
        out_specs=(
            pl.BlockSpec((1, tq, nx), lambda b, t: (b, t, 0)),      # q slab (scaled)
            pl.BlockSpec((1, tq, nx), lambda b, t: (b, t, 0)),      # k slab
            pl.BlockSpec((1, tq, nx), lambda b, t: (b, t, 0)),      # v slab
        ),
        compiler_params=pltpu.CompilerParams(
            dimension_semantics=("parallel", "parallel"),
            vmem_limit_bytes=vmem_limit),
    )(x, w_attn_bf, b_attn2)

    # Head-split layout (B, H, T, d).  k4/v4 are required by the `present` output layout
    # anyway (k4 == key.transpose(-2,-1), v4 == value); q4 is the only extra transpose and
    # it now moves bf16 data (half the bytes).
    def _split_heads(t):
        return t.reshape(B, T, n_head, d).transpose(0, 2, 1, 3)

    q4, k4, v4 = _split_heads(q), _split_heads(k), _split_heads(v)
    present = jnp.stack([k4, v4], axis=0)                           # (2, B, H, T, d) bf16

    # Hoisted mask arithmetic.  mask_mul stored bf16 (exact for a binary adjacency; a
    # weighted adj_mx would be rounded); mask_add kept f32 (exact -10000, only (T,T)).
    mask_mul = (bias_mask[None, :, :] + jnp.tril(adj_mx)).astype(jnp.bfloat16)   # (B,T,T)
    mask_add = (-10000.0) * (1.0 - bias_mask)                                    # (T,T) f32

    # ---- 2) fused attention + output projection ----
    attn_kernel = functools.partial(_attn_proj_kernel, n_head_block=hb,
                                    output_attentions=output_attentions)
    a_shape = jax.ShapeDtypeStruct((B, T, nx), jnp.float32)
    a_spec = pl.BlockSpec((1, tq, nx), lambda b, t, h: (b, t, 0))
    if output_attentions:
        out_shape = (a_shape, jax.ShapeDtypeStruct((B, n_head, T, T), jnp.bfloat16))
        out_specs = (a_spec, pl.BlockSpec((1, hb, tq, T), lambda b, t, h: (b, h, t, 0)))
    else:
        out_shape = a_shape
        out_specs = a_spec

    result = pl.pallas_call(
        attn_kernel,
        out_shape=out_shape,
        grid=(B, ntq, nhb),                      # head-block reduction axis last
        in_specs=[
            pl.BlockSpec((1, hb, tq, d), lambda b, t, h: (b, h, t, 0)),   # q heads
            pl.BlockSpec((1, hb, T, d), lambda b, t, h: (b, h, 0, 0)),    # k heads (full T)
            pl.BlockSpec((1, hb, T, d), lambda b, t, h: (b, h, 0, 0)),    # v heads (full T)
            pl.BlockSpec((1, tq, T), lambda b, t, h: (b, t, 0)),          # bias + tril(adj)
            pl.BlockSpec((tq, T), lambda b, t, h: (t, 0)),                # -10000*(1-bias)
            pl.BlockSpec((hb, d, nx), lambda b, t, h: (h, 0, 0)),         # W_proj head slices
            pl.BlockSpec((1, nx), lambda b, t, h: (0, 0)),                # b_proj
        ],
        out_specs=out_specs,
        scratch_shapes=[pltpu.VMEM((tq, nx), jnp.float32)],               # c_proj accumulator
        compiler_params=pltpu.CompilerParams(
            dimension_semantics=("parallel", "parallel", "arbitrary"),
            vmem_limit_bytes=vmem_limit),
    )(q4, k4, v4, mask_mul, mask_add, wp3, b_proj2)

    if output_attentions:
        a, attn_probs = result
        return a, present, attn_probs
    return result, present


def make_bias_mask(n_ctx: int, window_size):
    b = jnp.tril(jnp.ones((n_ctx, n_ctx), dtype=jnp.float32))
    if window_size is not None:
        b = b - jnp.tril(b, -(min(n_ctx, window_size) + 1))
    return b


# Pure-JAX reference (f32) for a sanity check of the fused kernels.
def _reference(x, w_attn, b_attn, w_proj, b_proj, bias_mask, adj_mx, n_head, scale):
    B, T, nx = x.shape
    d = nx // n_head
    qkv = x @ w_attn + b_attn
    q, k, v = jnp.split(qkv, 3, axis=-1)

    def split(t):
        return t.reshape(B, T, n_head, d).transpose(0, 2, 1, 3)

    q4, k4, v4 = split(q), split(k), split(v)
    s = jnp.einsum('bhqd,bhkd->bhqk', q4, k4)
    if scale:
        s = s / math.sqrt(d)
    bmask = bias_mask[None, None]
    adj = jnp.tril(adj_mx)[:, None]
    w = s * (bmask + adj) - 10000.0 * (1.0 - bmask)
    p = jax.nn.softmax(w, axis=-1)
    o = jnp.einsum('bhqk,bhkd->bhqd', p, v4)
    merged = o.transpose(0, 2, 1, 3).reshape(B, T, nx)
    a = merged @ w_proj + b_proj
    present = jnp.stack([k4, v4], axis=0)
    return a, present, p


if __name__ == "__main__":
    # Small config consistent with the module.
    B, T, nx = 2, 8, 32          # batch, n_ctx (seq), hidden
    n_head = 4                   # nx % n_head == 0
    window_size = 4
    scale = True

    key = jax.random.PRNGKey(0)
    kx, kadj, kw1, kw2 = jax.random.split(key, 4)

    x = jax.random.normal(kx, (B, T, nx), dtype=jnp.float32)

    # Dense structural adjacency matrix (binary), one per batch element.
    adj_mx = (jax.random.uniform(kadj, (B, T, T)) > 0.5).astype(jnp.float32)

    # Deterministic Conv1D parameter init (GPT-style: normal * 0.02, zero bias).
    w_attn = 0.02 * jax.random.normal(kw1, (nx, 3 * nx), dtype=jnp.float32)
    b_attn = jnp.zeros((3 * nx,), dtype=jnp.float32)
    w_proj = 0.02 * jax.random.normal(kw2, (nx, nx), dtype=jnp.float32)
    b_proj = jnp.zeros((nx,), dtype=jnp.float32)

    bias_mask = make_bias_mask(T, window_size)

    a, present, attn = strct_attention(
        x, w_attn, b_attn, w_proj, b_proj, bias_mask, adj_mx,
        n_head=n_head, scale=scale, output_attentions=True)
    jax.block_until_ready((a, present, attn))

    assert a.shape == (B, T, nx)
    assert present.shape == (2, B, n_head, T, nx // n_head)
    assert attn.shape == (B, n_head, T, T)

    # Sanity check vs pure-JAX f32 reference (loose tolerance: bf16 MXU/intermediates
    # + approx reciprocal in the softmax denominator).
    a_ref, present_ref, attn_ref = _reference(
        x, w_attn, b_attn, w_proj, b_proj, bias_mask, adj_mx, n_head, scale)
    assert float(jnp.max(jnp.abs(a - a_ref))) < 5e-2
    assert float(jnp.max(jnp.abs(present.astype(jnp.float32) - present_ref))) < 5e-2
    assert float(jnp.max(jnp.abs(attn.astype(jnp.float32) - attn_ref))) < 5e-2

    print("KERNEL_OK")
</pallas_src>

<mosaic_0001>
module attributes {stable_mosaic.version = 11 : i64} {
  func.func @_qkv_kernel(%arg0: i32, %arg1: i32, %arg2: memref<1x8x32xf32, #tpu.memory_space<vmem>>, %arg3: memref<32x96xbf16, #tpu.memory_space<vmem>>, %arg4: memref<1x96xf32, #tpu.memory_space<vmem>>, %arg5: memref<1x8x32xbf16, #tpu.memory_space<vmem>>, %arg6: memref<1x8x32xbf16, #tpu.memory_space<vmem>>, %arg7: memref<1x8x32xbf16, #tpu.memory_space<vmem>>) attributes {dimension_semantics = [#tpu.dimension_semantics<parallel>, #tpu.dimension_semantics<parallel>], iteration_bounds = array<i64: 2, 1>, scalar_prefetch = 0 : i64, scratch_operands = 0 : i64, tpu.core_type = #tpu.core_type<tc>, window_params = [{transform_indices = @transform_0, window_bounds = array<i64: 1, 8, 32>}, {pipeline_mode = #tpu.pipeline_mode<synchronous>, transform_indices = @transform_1, window_bounds = array<i64: 32, 96>}, {pipeline_mode = #tpu.pipeline_mode<synchronous>, transform_indices = @transform_2, window_bounds = array<i64: 1, 96>}, {transform_indices = @transform_3, window_bounds = array<i64: 1, 8, 32>}, {transform_indices = @transform_4, window_bounds = array<i64: 1, 8, 32>}, {transform_indices = @transform_5, window_bounds = array<i64: 1, 8, 32>}]} {
    %c0 = arith.constant 0 : index
    %c0_0 = arith.constant 0 : index
    %c0_1 = arith.constant 0 : index
    %0 = vector.load %arg2[%c0, %c0_0, %c0_1] : memref<1x8x32xf32, #tpu.memory_space<vmem>>, vector<1x8x32xf32>
    %1 = vector.shape_cast %0 : vector<1x8x32xf32> to vector<8x32xf32>
    %2 = arith.truncf %1 : vector<8x32xf32> to vector<8x32xbf16>
    %c0_2 = arith.constant 0 : index
    %c0_3 = arith.constant 0 : index
    %3 = vector.load %arg3[%c0_2, %c0_3] : memref<32x96xbf16, #tpu.memory_space<vmem>>, vector<32x96xbf16>
    %cst = arith.constant dense<0.000000e+00> : vector<8x96xf32>
    %4 = tpu.matmul %2, %3, %cst {dimension_numbers = #tpu.dot_dimension_numbers<[1], [0], [0], [1], [0, 0, 1, 1], [], []>} : vector<8x32xbf16>, vector<32x96xbf16>, vector<8x96xf32> -> vector<8x96xf32>
    %c0_4 = arith.constant 0 : index
    %c0_5 = arith.constant 0 : index
    %5 = vector.load %arg4[%c0_4, %c0_5] : memref<1x96xf32, #tpu.memory_space<vmem>>, vector<1x96xf32>
    %6 = vector.shape_cast %5 : vector<1x96xf32> to vector<96xf32>
    %7 = vector.shape_cast %6 : vector<96xf32> to vector<1x96xf32>
    %8 = vector.broadcast %7 : vector<1x96xf32> to vector<8x96xf32>
    %9 = arith.addf %4, %8 : vector<8x96xf32>
    %10 = vector.extract_strided_slice %9 {offsets = [0, 0], sizes = [8, 32], strides = [1, 1]} : vector<8x96xf32> to vector<8x32xf32>
    %cst_6 = arith.constant 0.353553385 : f32
    %11 = vector.broadcast %cst_6 : f32 to vector<8x32xf32>
    %12 = arith.mulf %10, %11 : vector<8x32xf32>
    %13 = arith.truncf %12 : vector<8x32xf32> to vector<8x32xbf16>
    %c0_7 = arith.constant 0 : index
    %c0_8 = arith.constant 0 : index
    %c0_9 = arith.constant 0 : index
    %14 = vector.load %arg5[%c0_7, %c0_8, %c0_9] : memref<1x8x32xbf16, #tpu.memory_space<vmem>>, vector<1x8x32xbf16>
    %15 = vector.shape_cast %14 : vector<1x8x32xbf16> to vector<8x32xbf16>
    %16 = vector.shape_cast %13 : vector<8x32xbf16> to vector<1x8x32xbf16>
    tpu.vector_store %arg5[%c0_7, %c0_8, %c0_9], %16 {strides = array<i32>} : memref<1x8x32xbf16, #tpu.memory_space<vmem>>, vector<1x8x32xbf16>,
    %17 = vector.extract_strided_slice %9 {offsets = [0, 32], sizes = [8, 32], strides = [1, 1]} : vector<8x96xf32> to vector<8x32xf32>
    %18 = arith.truncf %17 : vector<8x32xf32> to vector<8x32xbf16>
    %c0_10 = arith.constant 0 : index
    %c0_11 = arith.constant 0 : index
    %c0_12 = arith.constant 0 : index
    %19 = vector.load %arg6[%c0_10, %c0_11, %c0_12] : memref<1x8x32xbf16, #tpu.memory_space<vmem>>, vector<1x8x32xbf16>
    %20 = vector.shape_cast %19 : vector<1x8x32xbf16> to vector<8x32xbf16>
    %21 = vector.shape_cast %18 : vector<8x32xbf16> to vector<1x8x32xbf16>
    tpu.vector_store %arg6[%c0_10, %c0_11, %c0_12], %21 {strides = array<i32>} : memref<1x8x32xbf16, #tpu.memory_space<vmem>>, vector<1x8x32xbf16>,
    %22 = vector.extract_strided_slice %9 {offsets = [0, 64], sizes = [8, 32], strides = [1, 1]} : vector<8x96xf32> to vector<8x32xf32>
    %23 = arith.truncf %22 : vector<8x32xf32> to vector<8x32xbf16>
    %c0_13 = arith.constant 0 : index
    %c0_14 = arith.constant 0 : index
    %c0_15 = arith.constant 0 : index
    %24 = vector.load %arg7[%c0_13, %c0_14, %c0_15] : memref<1x8x32xbf16, #tpu.memory_space<vmem>>, vector<1x8x32xbf16>
    %25 = vector.shape_cast %24 : vector<1x8x32xbf16> to vector<8x32xbf16>
    %26 = vector.shape_cast %23 : vector<8x32xbf16> to vector<1x8x32xbf16>
    tpu.vector_store %arg7[%c0_13, %c0_14, %c0_15], %26 {strides = array<i32>} : memref<1x8x32xbf16, #tpu.memory_space<vmem>>, vector<1x8x32xbf16>,
    return
  }
  func.func @transform_0(%arg0: i32, %arg1: i32) -> (i32, i32, i32) {
    %c0_i32 = arith.constant 0 : i32
    %c0_i32_0 = arith.constant 0 : i32
    return %arg0, %arg1, %c0_i32 : i32, i32, i32
  }
  func.func @transform_1(%arg0: i32, %arg1: i32) -> (i32, i32) {
    %c0_i32 = arith.constant 0 : i32
    %c0_i32_0 = arith.constant 0 : i32
    %c0_i32_1 = arith.constant 0 : i32
    return %c0_i32, %c0_i32_0 : i32, i32
  }
  func.func @transform_2(%arg0: i32, %arg1: i32) -> (i32, i32) {
    %c0_i32 = arith.constant 0 : i32
    %c0_i32_0 = arith.constant 0 : i32
    %c0_i32_1 = arith.constant 0 : i32
    return %c0_i32, %c0_i32_0 : i32, i32
  }
  func.func @transform_3(%arg0: i32, %arg1: i32) -> (i32, i32, i32) {
    %c0_i32 = arith.constant 0 : i32
    %c0_i32_0 = arith.constant 0 : i32
    return %arg0, %arg1, %c0_i32 : i32, i32, i32
  }
  func.func @transform_4(%arg0: i32, %arg1: i32) -> (i32, i32, i32) {
    %c0_i32 = arith.constant 0 : i32
    %c0_i32_0 = arith.constant 0 : i32
    return %arg0, %arg1, %c0_i32 : i32, i32, i32
  }
  func.func @transform_5(%arg0: i32, %arg1: i32) -> (i32, i32, i32) {
    %c0_i32 = arith.constant 0 : i32
    %c0_i32_0 = arith.constant 0 : i32
    return %arg0, %arg1, %c0_i32 : i32, i32, i32
  }
}

</mosaic_0001>

<llo_original>
// kernel: tpu_custom_call.1
$region0: #{tpu_custom_call.1}
  #allocation0 [shape = 'u32[]', space=smem, size = 0x4, offset = 0x4, fixed_abs, tag = 'smem constant byte address 0x4 - core index']
  #allocation1 [shape = 'u32[72,128]{1,0:T(1,128)}', space=vmem, size = 0x9000, scoped, tag = 'internal scratch']
  %s0 = inlined_call_operand.hbm [shape: f32[2,8,32], index: 0, kind: input, shape index: {}]
  %s1 = inlined_call_operand.hbm [shape: bf16[32,96], index: 1, kind: input, shape index: {}]
  %s2 = inlined_call_operand.vmem [shape: f32[1,96], index: 2, kind: input, shape index: {}]
  %s3 = inlined_call_operand.hbm [shape: bf16[2,8,32], index: 3, kind: output, shape index: {0}]
  %s4 = inlined_call_operand.hbm [shape: bf16[2,8,32], index: 4, kind: output, shape index: {1}]
  %s5 = inlined_call_operand.hbm [shape: bf16[2,8,32], index: 5, kind: output, shape index: {2}]
  %6 = xla_tuple %s3, %s4, %s5
  %s7 = sld [smem:[#allocation0]]
  $region69: #{tpu_custom_call.1} parent=0
    _
  %s9 = ssub.s32 1, %s7
  %s10 = scalar_select 0, %s9, %s7
  $region1: #{tpu_custom_call.1} parent=0
    #allocation2 [shape = 'u8[8192]{0}', space=vmem, size = 0x2000, scoped, tag = 'input window, operand 0']
    #allocation3 [shape = 's32[2]{0}', space=sflag, size = 0x8, scoped, tag = 'scoped memory for tpu_custom_call.1']
    #allocation4 [shape = 's32[2]{0}', space=sflag, size = 0x8, scoped, tag = 'scoped memory for tpu_custom_call.1']
    #allocation5 [shape = 'u8[8192]{0}', space=vmem, size = 0x2000, scoped, tag = 'input window, operand 1, single buffered']
    #allocation6 [shape = 's32[1]{0}', space=sflag, size = 0x4, scoped, tag = 'scoped memory for tpu_custom_call.1']
    #allocation7 [shape = 'u8[4096]{0}', space=vmem, size = 0x1000, scoped, tag = 'output window, operand 0']
    #allocation8 [shape = 'u8[4096]{0}', space=vmem, size = 0x1000, scoped, tag = 'output window, operand 1']
    #allocation9 [shape = 's32[2]{0}', space=sflag, size = 0x8, scoped, tag = 'scoped memory for tpu_custom_call.1']
    #allocation10 [shape = 'u8[4096]{0}', space=vmem, size = 0x1000, scoped, tag = 'output window, operand 2']
    %11 = vsyncpa [#allocation3], 0
    %s12 = scalar_lea.sflag [#allocation3], 1
    %13 = vsyncpa %s12, 0
    %14 = vsyncpa [#allocation6], 0
    %15 = vsyncpa [#allocation4], 0
    %s16 = scalar_lea.sflag [#allocation4], 1
    %17 = vsyncpa %s16, 0
    %18 = vsyncpa [#allocation9], 0
    %s19 = scalar_lea.sflag [#allocation9], 1
    %20 = vsyncpa %s19, 0
    loop: start=0, step=1, limit=4
    $region2: #{tpu_custom_call.1} parent=1 // loop_pre_header
      _
    $region3: #{tpu_custom_call.1} parent=1 // loop_header
      %s22 = sphi 0, %s26
      %p23 = scmp.ge.s32.totalorder %s22, 4
      %s29 = sphi 0, %s41
      %s30 = sphi 0, %s37
      %s31 = sphi 0, %s29
      %s32 = sphi 0, %s30
      %s33 = sphi 0, %s31
      %s34 = sphi 0, %s32
      %s46 = sphi 0, %s48
      %s49 = sphi 0, %s46
      %s50 = sphi 0, %s49
      %s66 = sphi 0, %s50
      %s70 = sphi 0, %s70
      %s72 = sphi 0, %s70
      %s73 = sphi 0, %s72
      %s87 = sphi 0, %s73
      %s91 = sphi 0, %s91
      %s93 = sphi 0, %s91
      %s94 = sphi 0, %s93
      %s108 = sphi 0, %s94
      %s116 = sphi 0, %s118
      %s119 = sphi 0, %s116
      %s120 = sphi 0, %s119
      %s136 = sphi 0, %s120
      %s144 = sphi 0, %s146
      %s147 = sphi 0, %s144
      %s148 = sphi 0, %s147
      %s164 = sphi 0, %s148
      %s172 = sphi 0, %s174
      %s175 = sphi 0, %s172
      %s176 = sphi 0, %s175
      %s192 = sphi 0, %s176
    $region4: #{tpu_custom_call.1} parent=1 // loop_header_branch
      %25 = sbr.rel (%p23) target = $region8
    $region5: #{tpu_custom_call.1} parent=1 // loop_body
      %s27 = ssub.s32 %s22, 1
      %s28 = ssub.s32 %s22, 2
      %s35 = sadd.s32 1, %s30
      %p36 = scmp.ge.s32.totalorder %s35, 1
      %s37 = scalar_select %p36, 0, %s35
      %s38 = sadd.s32 1, %s29
      %s39 = scalar_select %p36, %s38, %s29
      %p40 = scmp.ge.s32.totalorder %s39, 2
      %s41 = scalar_select %p40, 0, %s39
      %s42 = ssub.s32 %s29, %s41
      %s43 = ssub.s32 %s30, %s37
      %s44 = sor.u32 %s42, %s43
      %p45 = scmp.eq.s32.totalorder %s44, 0
      %s47 = sadd.s32 %s46, 1
      %s48 = scalar_select %p45, %s46, %s47
      %p51 = pneg %p45
      %p52 = scmp.eq.s32.totalorder %s22, 1
      %p53 = por %p51, %p52
      %p54 = scmp.ne.s32.totalorder %s46, %s49
      %p55 = scmp.eq.s32.totalorder %s22, 0
      %p56 = por %p54, %p55
      %p57 = scmp.ne.s32.totalorder %s46, %s49
      %p58 = scmp.eq.s32.totalorder %s27, 1
      %p59 = por %p57, %p58
      %p60 = scmp.ne.s32.totalorder %s49, %s50
      %p61 = scmp.eq.s32.totalorder %s27, 0
      %p62 = por %p60, %p61
      %p63 = scmp.ne.s32.totalorder %s49, %s50
      %p64 = scmp.eq.s32.totalorder %s28, 1
      %p65 = por %p63, %p64
      %p67 = scmp.ne.s32.totalorder %s50, %s66
      %p68 = scmp.eq.s32.totalorder %s28, 0
      %p69 = por %p67, %p68
      %s71 = sadd.s32 %s70, 1
      %p74 = scmp.eq.s32.totalorder %s22, 1
      %p75 = scmp.ne.s32.totalorder %s70, %s72
      %p76 = scmp.eq.s32.totalorder %s22, 0
      %p77 = por %p75, %p76
      %p78 = scmp.ne.s32.totalorder %s70, %s72
      %p79 = scmp.eq.s32.totalorder %s27, 1
      %p80 = por %p78, %p79
      %p81 = scmp.ne.s32.totalorder %s72, %s73
      %p82 = scmp.eq.s32.totalorder %s27, 0
      %p83 = por %p81, %p82
      %p84 = scmp.ne.s32.totalorder %s72, %s73
      %p85 = scmp.eq.s32.totalorder %s28, 1
      %p86 = por %p84, %p85
      %p88 = scmp.ne.s32.totalorder %s73, %s87
      %p89 = scmp.eq.s32.totalorder %s28, 0
      %p90 = por %p88, %p89
      %s92 = sadd.s32 %s91, 1
      %p95 = scmp.eq.s32.totalorder %s22, 1
      %p96 = scmp.ne.s32.totalorder %s91, %s93
      %p97 = scmp.eq.s32.totalorder %s22, 0
      %p98 = por %p96, %p97
      %p99 = scmp.ne.s32.totalorder %s91, %s93
      %p100 = scmp.eq.s32.totalorder %s27, 1
      %p101 = por %p99, %p100
      %p102 = scmp.ne.s32.totalorder %s93, %s94
      %p103 = scmp.eq.s32.totalorder %s27, 0
      %p104 = por %p102, %p103
      %p105 = scmp.ne.s32.totalorder %s93, %s94
      %p106 = scmp.eq.s32.totalorder %s28, 1
      %p107 = por %p105, %p106
      %p109 = scmp.ne.s32.totalorder %s94, %s108
      %p110 = scmp.eq.s32.totalorder %s28, 0
      %p111 = por %p109, %p110
      %s112 = ssub.s32 %s29, %s41
      %s113 = ssub.s32 %s30, %s37
      %s114 = sor.u32 %s112, %s113
      %p115 = scmp.eq.s32.totalorder %s114, 0
      %s117 = sadd.s32 %s116, 1
      %s118 = scalar_select %p115, %s116, %s117
      %p121 = pneg %p115
      %p122 = scmp.eq.s32.totalorder %s22, 1
      %p123 = por %p121, %p122
      %p124 = scmp.ne.s32.totalorder %s116, %s119
      %p125 = scmp.eq.s32.totalorder %s22, 0
      %p126 = por %p124, %p125
      %p127 = scmp.ne.s32.totalorder %s116, %s119
      %p128 = scmp.eq.s32.totalorder %s27, 1
      %p129 = por %p127, %p128
      %p130 = scmp.ne.s32.totalorder %s119, %s120
      %p131 = scmp.eq.s32.totalorder %s27, 0
      %p132 = por %p130, %p131
      %p133 = scmp.ne.s32.totalorder %s119, %s120
      %p134 = scmp.eq.s32.totalorder %s28, 1
      %p135 = por %p133, %p134
      %p137 = scmp.ne.s32.totalorder %s120, %s136
      %p138 = scmp.eq.s32.totalorder %s28, 0
      %p139 = por %p137, %p138
      %s140 = ssub.s32 %s29, %s41
      %s141 = ssub.s32 %s30, %s37
      %s142 = sor.u32 %s140, %s141
      %p143 = scmp.eq.s32.totalorder %s142, 0
      %s145 = sadd.s32 %s144, 1
      %s146 = scalar_select %p143, %s144, %s145
      %p149 = pneg %p143
      %p150 = scmp.eq.s32.totalorder %s22, 1
      %p151 = por %p149, %p150
      %p152 = scmp.ne.s32.totalorder %s144, %s147
      %p153 = scmp.eq.s32.totalorder %s22, 0
      %p154 = por %p152, %p153
      %p155 = scmp.ne.s32.totalorder %s144, %s147
      %p156 = scmp.eq.s32.totalorder %s27, 1
      %p157 = por %p155, %p156
      %p158 = scmp.ne.s32.totalorder %s147, %s148
      %p159 = scmp.eq.s32.totalorder %s27, 0
      %p160 = por %p158, %p159
      %p161 = scmp.ne.s32.totalorder %s147, %s148
      %p162 = scmp.eq.s32.totalorder %s28, 1
      %p163 = por %p161, %p162
      %p165 = scmp.ne.s32.totalorder %s148, %s164
      %p166 = scmp.eq.s32.totalorder %s28, 0
      %p167 = por %p165, %p166
      %s168 = ssub.s32 %s29, %s41
      %s169 = ssub.s32 %s30, %s37
      %s170 = sor.u32 %s168, %s169
      %p171 = scmp.eq.s32.totalorder %s170, 0
      %s173 = sadd.s32 %s172, 1
      %s174 = scalar_select %p171, %s172, %s173
      %p177 = pneg %p171
      %p178 = scmp.eq.s32.totalorder %s22, 1
      %p179 = por %p177, %p178
      %p180 = scmp.ne.s32.totalorder %s172, %s175
      %p181 = scmp.eq.s32.totalorder %s22, 0
      %p182 = por %p180, %p181
      %p183 = scmp.ne.s32.totalorder %s172, %s175
      %p184 = scmp.eq.s32.totalorder %s27, 1
      %p185 = por %p183, %p184
      %p186 = scmp.ne.s32.totalorder %s175, %s176
      %p187 = scmp.eq.s32.totalorder %s27, 0
      %p188 = por %p186, %p187
      %p189 = scmp.ne.s32.totalorder %s175, %s176
      %p190 = scmp.eq.s32.totalorder %s28, 1
      %p191 = por %p189, %p190
      %p193 = scmp.ne.s32.totalorder %s176, %s192
      %p194 = scmp.eq.s32.totalorder %s28, 0
      %p195 = por %p193, %p194
      %p196 = scmp.le.s32.totalorder 1, %s22
      %p197 = scmp.lt.s32.totalorder %s22, 3
      %p198 = pnand %p196, %p197
      %p199 = pneg %p198
      // Predicated region
      $region9: #{tpu_custom_call.1} parent=5 // pred_check
        _
      $region10: #{tpu_custom_call.1} parent=5 // pred_check_branch
        %201 = sbr.rel (%p198) target = $region12
      $region11: #{tpu_custom_call.1} parent=5 // pred_region
        %s202 = ssub.s32 %s22, 1
        // Predicated region
        $region13: #{tpu_custom_call.1} parent=11 // pred_check
          %p203 = pneg %p83
        $region14: #{tpu_custom_call.1} parent=11 // pred_check_branch
          %205 = sbr.rel (%p203) target = $region16
        $region15: #{tpu_custom_call.1} parent=11 // pred_region
          %207 = vsyncadd [#allocation6], 0
          %s208 = sshll.u32 %s1, 4
          %s209 = int_to_ptr.hbm [resolvable:$true] %s208
          %s210 = sshll.u32 [#allocation5], 4
          %s211 = int_to_ptr.vmem [resolvable:$true] %s210
          %216 = dma.hbm_to_vmem [thread:$0]  %s209, 256, %s211, [#allocation6], 64, 64, 4
        $region16: #{tpu_custom_call.1} parent=11 // pred_fallthru
          _
        // Predicated region
        $region17: #{tpu_custom_call.1} parent=11 // pred_check
          %p217 = pneg %p104
        $region18: #{tpu_custom_call.1} parent=11 // pred_check_branch
          %219 = sbr.rel (%p217) target = $region20
        $region19: #{tpu_custom_call.1} parent=11 // pred_region
          _
        $region20: #{tpu_custom_call.1} parent=11 // pred_fallthru
          _
      $region12: #{tpu_custom_call.1} parent=5 // pred_fallthru
        _
      %p220 = scmp.lt.s32.totalorder %s22, 2
      // Predicated region
      $region21: #{tpu_custom_call.1} parent=5 // pred_check
        %p221 = pneg %p220
      $region22: #{tpu_custom_call.1} parent=5 // pred_check_branch
        %223 = sbr.rel (%p221) target = $region24
      $region23: #{tpu_custom_call.1} parent=5 // pred_region
        // Predicated region
        $region25: #{tpu_custom_call.1} parent=23 // pred_check
          %p224 = pneg %p56
        $region26: #{tpu_custom_call.1} parent=23 // pred_check_branch
          %226 = sbr.rel (%p224) target = $region28
        $region27: #{tpu_custom_call.1} parent=23 // pred_region
          %s227 = sand.u32 %s46, 1
          %s228 = scalar_lea.sflag [#allocation3], %s227
          %s229 = sand.u32 %s46, 1
          %s230 = smul.addr %s229, 8
          %s231 = scalar_lea.vmem [#allocation2], %s230
          %233 = vsyncadd %s228, 0
          %s234 = sadd.s32 %s30, %s29
          %s235 = smul.addr %s234, 8
          %s236 = scalar_lea.hbm %s0, %s235
          %s238 = sshll.u32 %s236, 4
          %s239 = int_to_ptr.hbm [resolvable:$true] %s238
          %s240 = sshll.u32 %s231, 4
          %s241 = int_to_ptr.vmem [resolvable:$true] %s240
          %243 = dma.hbm_to_vmem [thread:$0]  %s239, 128, %s241, %s228
        $region28: #{tpu_custom_call.1} parent=23 // pred_fallthru
          _
      $region24: #{tpu_custom_call.1} parent=5 // pred_fallthru
        _
      %p244 = scmp.le.s32.totalorder 1, %s22
      %p245 = scmp.lt.s32.totalorder %s22, 3
      %p246 = pnand %p244, %p245
      %p247 = pneg %p246
      // Predicated region
      $region29: #{tpu_custom_call.1} parent=5 // pred_check
        _
      $region30: #{tpu_custom_call.1} parent=5 // pred_check_branch
        %249 = sbr.rel (%p246) target = $region32
      $region31: #{tpu_custom_call.1} parent=5 // pred_region
        %s250 = ssub.s32 %s22, 1
        %s251 = sand.u32 %s49, 1
        %s252 = scalar_lea.sflag [#allocation3], %s251
        %s253 = sand.u32 %s49, 1
        %s254 = smul.addr %s253, 8
        %s255 = scalar_lea.vmem [#allocation2], %s254
        // Predicated region
        $region33: #{tpu_custom_call.1} parent=31 // pred_check
          %p256 = pneg %p62
        $region34: #{tpu_custom_call.1} parent=31 // pred_check_branch
          %258 = sbr.rel (%p256) target = $region36
        $region35: #{tpu_custom_call.1} parent=31 // pred_region
          %260 = dma.done %s252, 128
        $region36: #{tpu_custom_call.1} parent=31 // pred_fallthru
          _
        // Predicated region
        $region37: #{tpu_custom_call.1} parent=31 // pred_check
          %p261 = pneg %p83
        $region38: #{tpu_custom_call.1} parent=31 // pred_check_branch
          %263 = sbr.rel (%p261) target = $region40
        $region39: #{tpu_custom_call.1} parent=31 // pred_region
          %265 = dma.done [#allocation6], 256
        $region40: #{tpu_custom_call.1} parent=31 // pred_fallthru
          _
        %s266 = sand.u32 %s49, 1
        %s267 = scalar_lea.sflag [#allocation3], %s266
        %s268 = sand.u32 %s49, 1
        %s269 = smul.addr %s268, 8
        %s270 = scalar_lea.vmem [#allocation2], %s269
        %p271 = pneg %p62
        %p272 = pneg %p59
        %p273 = pneg %p83
        %p274 = pneg %p80
        %p275 = pneg %p104
        %p276 = pneg %p101
        %p277 = pneg %p132
        %p278 = pneg %p129
        %s279 = sand.u32 %s119, 1
        %s280 = scalar_lea.sflag [#allocation4], %s279
        %s281 = sand.u32 %s119, 1
        %s282 = smul.addr %s281, 4
        %s283 = scalar_lea.vmem [#allocation7], %s282
        %p284 = pneg %p160
        %p285 = pneg %p157
        %s286 = sand.u32 %s27, 1
        %s287 = scalar_lea.sflag [#allocation9], %s286
        %s288 = sand.u32 %s147, 1
        %s289 = smul.addr %s288, 4
        %s290 = scalar_lea.vmem [#allocation8], %s289
        %p291 = pneg %p188
        %p292 = pneg %p185
        %s293 = sand.u32 %s27, 1
        %s294 = scalar_lea.sflag [#allocation9], %s293
        %s295 = sand.u32 %s175, 1
        %s296 = smul.addr %s295, 4
        %s297 = scalar_lea.vmem [#allocation10], %s296
        %v299 = vld [vmem:[%s255] sm:$0xff]
        %v300 = vpack.c.bf16 %v299, %v299
        %v301 = vld [vmem:[#allocation5] sm:$0xf]
        %v302 = vld [vmem:[#allocation5 + $0x4] sm:$0xf]
        %v303 = vld [vmem:[#allocation5 + $0x8] sm:$0xf]
        %v304 = vld [vmem:[#allocation5 + $0xc] sm:$0xf]
        %v305 = vld [vmem:[%s2] sm:$0x1]
        %v307 = vperm.slane %v305, 0
        %v313 = vunpack.c.l.b16 %v301
        %v314 = vunpack.c.l.b16 %v302
        %v315 = vunpack.c.l.b16 %v303
        %v316 = vunpack.c.l.b16 %v304
        %v317 = vpack.c.b16 %v314, %v313
        %v318 = vpack.c.b16 %v316, %v315
        %vm321 = vcmask 261120
        %v323 = vsel %vm321, %v300, 0
        %325 = vmatpush.bf16.msra.mxu0 0
        %326 = vmatpush.bf16.msra.mxu0 0
        %327 = vmatpush.bf16.msra.mxu0 0
        %328 = vmatpush.bf16.msra.mxu0 0
        %329 = vmatpush.bf16.msra.mxu0 0
        %330 = vmatpush.bf16.msra.mxu0 0
        %331 = vmatpush.bf16.msra.mxu0 %v318
        %332 = vmatpush.bf16.msra.mxu0 %v317
        %333 = vmatmul.bf16.gmra.mxu0 %v323
        %v334 = vpop.f32.mrf.mxu0
        %v335 = vadd.f32 %v307, %v334
        %v336 = vpop.f32.mrf.mxu0
        %337 = vdwg.mxu0
        %v338 = vmul.f32 %v335, 0.35355338
        %v339 = vpack.c.bf16 %v338, %v338
        %vm340 = vcmask 257024
        %341 = vst.msk [vmem:[%s283] sm:$0xf] %vm340, %v339
        %v342 = vpack.c.bf16 %v335, %v335
        %344 = vrot.lane.b32.xlu0 %v342, 96
        %v345 = vpop.permute.xlu0 %344
        %347 = vst.msk [vmem:[%s290] sm:$0xf] %vm340, %v345
        %348 = vrot.lane.b32.xlu0 %v342, 64
        %v349 = vpop.permute.xlu0 %348
        %351 = vst.msk [vmem:[%s297] sm:$0xf] %vm340, %v349
        %s352 = sand.u32 %s119, 1
        %s353 = scalar_lea.sflag [#allocation4], %s352
        %s354 = sand.u32 %s119, 1
        %s355 = smul.addr %s354, 4
        %s356 = scalar_lea.vmem [#allocation7], %s355
        %s357 = sand.u32 %s27, 1
        %s358 = scalar_lea.sflag [#allocation9], %s357
        %s359 = sand.u32 %s147, 1
        %s360 = smul.addr %s359, 4
        %s361 = scalar_lea.vmem [#allocation8], %s360
        %s362 = sand.u32 %s27, 1
        %s363 = scalar_lea.sflag [#allocation9], %s362
        %s364 = sand.u32 %s175, 1
        %s365 = smul.addr %s364, 4
        %s366 = scalar_lea.vmem [#allocation10], %s365
        // Predicated region
        $region41: #{tpu_custom_call.1} parent=31 // pred_check
          %p367 = pneg %p129
        $region42: #{tpu_custom_call.1} parent=31 // pred_check_branch
          %369 = sbr.rel (%p367) target = $region44
        $region43: #{tpu_custom_call.1} parent=31 // pred_region
          %371 = vsyncadd %s353, 0
          %s372 = sadd.s32 %s32, %s31
          %s373 = smul.addr %s372, 4
          %s374 = scalar_lea.hbm %s3, %s373
          %s376 = sshll.u32 %s356, 4
          %s377 = int_to_ptr.vmem [resolvable:$true] %s376
          %s378 = sshll.u32 %s374, 4
          %s379 = int_to_ptr.hbm [resolvable:$true] %s378
          %381 = dma.vmem_to_hbm [thread:$0]  %s377, 64, %s379, %s353
        $region44: #{tpu_custom_call.1} parent=31 // pred_fallthru
          _
        // Predicated region
        $region45: #{tpu_custom_call.1} parent=31 // pred_check
          %p382 = pneg %p157
        $region46: #{tpu_custom_call.1} parent=31 // pred_check_branch
          %384 = sbr.rel (%p382) target = $region48
        $region47: #{tpu_custom_call.1} parent=31 // pred_region
          %386 = vsyncadd %s358, 0
          %s387 = sadd.s32 %s32, %s31
          %s388 = smul.addr %s387, 4
          %s389 = scalar_lea.hbm %s4, %s388
          %s391 = sshll.u32 %s361, 4
          %s392 = int_to_ptr.vmem [resolvable:$true] %s391
          %s393 = sshll.u32 %s389, 4
          %s394 = int_to_ptr.hbm [resolvable:$true] %s393
          %396 = dma.vmem_to_hbm [thread:$0]  %s392, 64, %s394, %s358
        $region48: #{tpu_custom_call.1} parent=31 // pred_fallthru
          _
        // Predicated region
        $region49: #{tpu_custom_call.1} parent=31 // pred_check
          %p397 = pneg %p185
        $region50: #{tpu_custom_call.1} parent=31 // pred_check_branch
          %399 = sbr.rel (%p397) target = $region52
        $region51: #{tpu_custom_call.1} parent=31 // pred_region
          %401 = vsyncadd %s363, 0
          %s402 = sadd.s32 %s32, %s31
          %s403 = smul.addr %s402, 4
          %s404 = scalar_lea.hbm %s5, %s403
          %s406 = sshll.u32 %s366, 4
          %s407 = int_to_ptr.vmem [resolvable:$true] %s406
          %s408 = sshll.u32 %s404, 4
          %s409 = int_to_ptr.hbm [resolvable:$true] %s408
          %411 = dma.vmem_to_hbm [thread:$0]  %s407, 64, %s409, %s363
        $region52: #{tpu_custom_call.1} parent=31 // pred_fallthru
          _
      $region32: #{tpu_custom_call.1} parent=5 // pred_fallthru
        _
      %p412 = scmp.le.s32.totalorder 2, %s22
      // Predicated region
      $region53: #{tpu_custom_call.1} parent=5 // pred_check
        %p413 = pneg %p412
      $region54: #{tpu_custom_call.1} parent=5 // pred_check_branch
        %415 = sbr.rel (%p413) target = $region56
      $region55: #{tpu_custom_call.1} parent=5 // pred_region
        %s416 = ssub.s32 %s22, 2
        // Predicated region
        $region57: #{tpu_custom_call.1} parent=55 // pred_check
          %p417 = pneg %p135
        $region58: #{tpu_custom_call.1} parent=55 // pred_check_branch
          %419 = sbr.rel (%p417) target = $region60
        $region59: #{tpu_custom_call.1} parent=55 // pred_region
          %s420 = sand.u32 %s120, 1
          %s421 = scalar_lea.sflag [#allocation4], %s420
          %s422 = sand.u32 %s120, 1
          %s423 = smul.addr %s422, 4
          %s424 = scalar_lea.vmem [#allocation7], %s423
          %426 = dma.done %s421, 64
        $region60: #{tpu_custom_call.1} parent=55 // pred_fallthru
          _
        // Predicated region
        $region61: #{tpu_custom_call.1} parent=55 // pred_check
          %p427 = pneg %p163
        $region62: #{tpu_custom_call.1} parent=55 // pred_check_branch
          %429 = sbr.rel (%p427) target = $region64
        $region63: #{tpu_custom_call.1} parent=55 // pred_region
          %s430 = sand.u32 %s28, 1
          %s431 = scalar_lea.sflag [#allocation9], %s430
          %s432 = sand.u32 %s148, 1
          %s433 = smul.addr %s432, 4
          %s434 = scalar_lea.vmem [#allocation8], %s433
          %436 = dma.done %s431, 64
        $region64: #{tpu_custom_call.1} parent=55 // pred_fallthru
          _
        // Predicated region
        $region65: #{tpu_custom_call.1} parent=55 // pred_check
          %p437 = pneg %p191
        $region66: #{tpu_custom_call.1} parent=55 // pred_check_branch
          %439 = sbr.rel (%p437) target = $region68
        $region67: #{tpu_custom_call.1} parent=55 // pred_region
          %s440 = sand.u32 %s28, 1
          %s441 = scalar_lea.sflag [#allocation9], %s440
          %s442 = sand.u32 %s176, 1
          %s443 = smul.addr %s442, 4
          %s444 = scalar_lea.vmem [#allocation10], %s443
          %446 = dma.done %s441, 64
        $region68: #{tpu_custom_call.1} parent=55 // pred_fallthru
          _
      $region56: #{tpu_custom_call.1} parent=5 // pred_fallthru
        _
    $region6: #{tpu_custom_call.1} parent=1 // loop_footer
      %s26 = sadd.s32 1, %s22
    $region7: #{tpu_custom_call.1} parent=1 // loop_footer_branch
      %21 = sbr.rel target = $region3
    $region8: #{tpu_custom_call.1} parent=1 // loop_exit
      _
    %447 = vsyncpa [#allocation3], 1
    %s448 = scalar_lea.sflag [#allocation3], 1
    %449 = vsyncpa %s448, 1
    %450 = vsyncpa [#allocation6], 1
    %451 = vsyncpa [#allocation4], 1
    %s452 = scalar_lea.sflag [#allocation4], 1
    %453 = vsyncpa %s452, 1
    %454 = vsyncpa [#allocation9], 1
    %s455 = scalar_lea.sflag [#allocation9], 1
    %456 = vsyncpa %s455, 1

</llo_original>
